<compile_context>
chip_gen: v5e
topology: v5e:2x2
jax: 0.10.0
libtpu: 0.0.40
codegen_flags: <defaults>
</compile_context>

<pallas_src>
import jax
import jax.numpy as jnp
from jax.experimental import pallas as pl
from jax.experimental.pallas import tpu as pltpu


def actor_aggregate_kernel(wa_ref, w1_ref, x_ref, out_ref):
    # Batch-last layout: batch lives on the 128-lane axis everywhere.
    n_pred, h_rows = w1_ref.shape                  # N, H1p   (static)
    t_dim = (wa_ref.shape[0] - h_rows) // n_pred   # T        (static)

    # Fused block-diagonal matmul (bf16 operands, f32 accumulation):
    #   rows [0:H)        : fc0 pre-activation (bias folded via ones column)
    #   row  H            : ones passthrough (feeds the folded fc1 bias)
    #   rows [H+1:H1p)    : zero padding (sublane alignment)
    #   rows [H1p:H1p+NT) : all torque-predictor outputs
    a = jnp.dot(wa_ref[...], x_ref[...], preferred_element_type=jnp.float32)

    # fc0 ReLU (ones row survives relu) + fc1 with folded bias.
    h_aug = jnp.maximum(a[:h_rows, :], 0.0)        # (H1p, TB) f32
    logits = jnp.dot(w1_ref[...], h_aug.astype(jnp.bfloat16),
                     preferred_element_type=jnp.float32)   # (N, TB)

    # softmax over the predictor axis (axis 0; sublane reductions -> XLU).
    m = jnp.max(logits, axis=0, keepdims=True)     # (1, TB)
    e = jnp.exp(logits - m)                        # (N, TB)  EUP
    denom = jnp.sum(e, axis=0, keepdims=True)      # (1, TB)
    x = e * pl.reciprocal(denom, approx=True)      # (N, TB)  EUP vrcp

    # Weighted aggregation of the predictor outputs; init from first term,
    # lane-dense 2-D FMAs, static unroll over N.
    tq = a[h_rows:, :]                             # (N*T, TB) f32
    tout = x[0:1, :] * tq[0:t_dim, :]
    for n in range(1, n_pred):
        tout = tout + x[n:n + 1, :] * tq[n * t_dim:(n + 1) * t_dim, :]

    # One full-tile store: rows [0,T) torques, rows [T,T+N) softmax weights.
    out_ref[...] = jnp.concatenate([tout, x], axis=0)


def actor_aggregate(feat, w0, b0, w1, b1, pred_in, pred_ws):
    """feat (B, D_in); w0 (H, D_in); b0 (H,); w1 (N, H); b1 (N,);
    pred_in (B, d_pred); pred_ws (N, T, d_pred).
    Returns (torques (B, T), softmax weights (B, N)) — module semantics."""
    B, d_in = feat.shape
    H = w0.shape[0]
    N, T, d_pred = pred_ws.shape

    H1p = ((H + 1 + 7) // 8) * 8          # fc0 rows + ones row, sublane padded
    C = d_in + d_pred + 1                 # shared contraction dim (+ ones row)
    R = H1p + N * T                       # fused output rows

    # --- fused block-diagonal weight, biases folded, bf16 ---------------------
    wa = jnp.zeros((R, C), jnp.float32)
    wa = wa.at[:H, :d_in].set(w0)
    wa = wa.at[:H, C - 1].set(b0)                               # b0 column
    wa = wa.at[H, C - 1].set(1.0)                               # ones passthrough
    wa = wa.at[H1p:, d_in:d_in + d_pred].set(pred_ws.reshape(N * T, d_pred))
    wa = wa.astype(jnp.bfloat16)

    w1a = jnp.zeros((N, H1p), jnp.float32)
    w1a = w1a.at[:, :H].set(w1)
    w1a = w1a.at[:, H].set(b1)                                  # b1 column
    w1a = w1a.astype(jnp.bfloat16)

    # --- batch-last activation slab (lane-padded batch, trailing ones row) ----
    Bp = ((B + 127) // 128) * 128
    xa = jnp.zeros((C, Bp), jnp.float32)
    xa = xa.at[:d_in, :B].set(feat.T)
    xa = xa.at[d_in:d_in + d_pred, :B].set(pred_in.T)
    xa = xa.at[C - 1, :B].set(1.0)
    xa = xa.astype(jnp.bfloat16)
    # TODO(synk): keep the surrounding model batch-last (feature-major)
    # end-to-end so these transposes/pads and the output .T below disappear.

    # Batch tile: largest 128-multiple dividing Bp (>=256 fills v6e/v7x MXU).
    TB = next(t for t in (1024, 512, 256, 128) if Bp % t == 0)
    grid = (Bp // TB,)

    flops = 2 * Bp * (R * C + N * H1p) + 2 * Bp * N * T
    bytes_accessed = 2 * (R * C + N * H1p + C * Bp) + 4 * (T + N) * Bp
    cost = pl.CostEstimate(flops=flops,
                           transcendentals=Bp * (N + 1),
                           bytes_accessed=bytes_accessed)

    out = pl.pallas_call(
        actor_aggregate_kernel,
        out_shape=jax.ShapeDtypeStruct((T + N, Bp), jnp.float32),
        grid=grid,
        in_specs=[
            pl.BlockSpec((R, C), lambda i: (0, 0)),      # W_A   (VMEM-resident)
            pl.BlockSpec((N, H1p), lambda i: (0, 0)),    # W1_aug (VMEM-resident)
            pl.BlockSpec((C, TB), lambda i: (0, i)),     # activations, B tile
        ],
        out_specs=pl.BlockSpec((T + N, TB), lambda i: (0, i)),
        compiler_params=pltpu.CompilerParams(
            dimension_semantics=("parallel",)),
        cost_estimate=cost,
    )(wa, w1a, xa)

    torques = out[:T, :B].T                                  # (B, T)
    x = out[T:, :B].T                                        # (B, N)
    return torques, x


# --- glue helpers (the PyTorch module calls undefined external helpers; we
#     model them as deterministic slices of the input tensors) ---------------

def remove_torque(s0, state_feature_size):
    # drop trailing torque entries of the state vector
    return s0[..., :state_feature_size]


def get_arm1_end_points(s_target, target_feature_size):
    # take the leading end-point coordinates of the target vector
    return s_target[..., :target_feature_size]


if __name__ == "__main__":
    key = jax.random.PRNGKey(0)

    # module hyper-params
    state_feature_size = 12
    target_feature_size = 4
    n_torque_predictors = 4       # N
    expand_ratio = 2
    torque_dim = 4                # T (output dim of each torque predictor)
    batch = 128                   # B -> fills one 128-lane vreg row

    input_size = state_feature_size + target_feature_size    # 16
    hidden = input_size * expand_ratio                        # 32

    keys = jax.random.split(key, 10)

    # deterministic parameter init (PyTorch Linear layout: (out, in))
    w0 = jax.random.uniform(keys[0], (hidden, input_size),
                            minval=-1.0, maxval=1.0,
                            dtype=jnp.float32) / jnp.sqrt(input_size)
    b0 = jax.random.uniform(keys[1], (hidden,),
                            minval=-1.0, maxval=1.0,
                            dtype=jnp.float32) / jnp.sqrt(input_size)
    w1 = jax.random.uniform(keys[2], (n_torque_predictors, hidden),
                            minval=-1.0, maxval=1.0,
                            dtype=jnp.float32) / jnp.sqrt(hidden)
    b1 = jax.random.uniform(keys[3], (n_torque_predictors,),
                            minval=-1.0, maxval=1.0,
                            dtype=jnp.float32) / jnp.sqrt(hidden)

    # example inputs: s0 carries state features + torque tail, s_target targets
    s0 = jax.random.normal(keys[4], (batch, state_feature_size + torque_dim),
                           dtype=jnp.float32)
    s_target = jax.random.normal(keys[5], (batch, target_feature_size + 4),
                                 dtype=jnp.float32)

    # synthetic torque predictors: deterministic linear maps pr(s0, s_target).
    # TODO(synk): real torque_predictors are arbitrary external nn.Modules;
    # modeled here as linear maps fused into the kernel.
    pred_in = jnp.concatenate([s0, s_target], axis=-1)        # (B, d_pred)
    d_pred = pred_in.shape[-1]
    pred_ws = jax.random.normal(
        keys[6], (n_torque_predictors, torque_dim, d_pred),
        dtype=jnp.float32) * 0.1                              # (N, T, d_pred)

    # feature concat (glue, matches torch.cat([...], -1))
    feat = jnp.concatenate(
        [remove_torque(s0, state_feature_size),
         get_arm1_end_points(s_target, target_feature_size)],
        axis=-1)                                              # (B, input_size)

    torques_out, x_out = actor_aggregate(feat, w0, b0, w1, b1, pred_in, pred_ws)
    jax.block_until_ready((torques_out, x_out))

    # --- reference 1: same bf16-quantized operands, f32 accumulation ---------
    # (isolates kernel structure; only approx-reciprocal differs -> tight tol)
    bf = lambda v: v.astype(jnp.bfloat16)
    h_q = jnp.maximum(
        jnp.dot(bf(feat), bf(w0).T, preferred_element_type=jnp.float32)
        + bf(b0).astype(jnp.float32), 0.0)
    logits_q = (jnp.dot(bf(h_q), bf(w1).T, preferred_element_type=jnp.float32)
                + bf(b1).astype(jnp.float32))
    x_q = jax.nn.softmax(logits_q, axis=-1)
    tq_q = jnp.einsum("bd,ntd->bnt", bf(pred_in), bf(pred_ws),
                      preferred_element_type=jnp.float32)     # (B, N, T)
    t_q = jnp.sum(tq_q * x_q[:, :, None], axis=1)             # (B, T)
    assert jnp.allclose(x_out, x_q, atol=2e-3, rtol=2e-3), \
        "softmax weights mismatch (bf16-matched reference)"
    assert jnp.allclose(torques_out, t_q, atol=2e-3, rtol=2e-3), \
        "aggregated torques mismatch (bf16-matched reference)"

    # --- reference 2: full-f32 module semantics (loose tol for bf16 operands)
    h_ref = jnp.maximum(feat @ w0.T + b0, 0.0)
    logits_ref = h_ref @ w1.T + b1
    x_ref = jax.nn.softmax(logits_ref, axis=-1)
    tq_ref = jnp.einsum("bd,ntd->bnt", pred_in, pred_ws)
    t_ref = jnp.sum(tq_ref * x_ref[:, :, None], axis=1)
    assert jnp.allclose(x_out, x_ref, atol=5e-2, rtol=5e-2), \
        "softmax weights drifted from f32 semantics"
    assert jnp.allclose(torques_out, t_ref, atol=5e-2, rtol=5e-2), \
        "aggregated torques drifted from f32 semantics"

    print("KERNEL_OK")
</pallas_src>

<mosaic_0001>
module attributes {stable_mosaic.version = 11 : i64} {
  func.func @actor_aggregate_kernel(%arg0: i32, %arg1: memref<56x41xbf16, #tpu.memory_space<vmem>>, %arg2: memref<4x40xbf16, #tpu.memory_space<vmem>>, %arg3: memref<41x128xbf16, #tpu.memory_space<vmem>>, %arg4: memref<8x128xf32, #tpu.memory_space<vmem>>) attributes {dimension_semantics = [#tpu.dimension_semantics<parallel>], iteration_bounds = array<i64: 1>, scalar_prefetch = 0 : i64, scratch_operands = 0 : i64, tpu.core_type = #tpu.core_type<tc>, window_params = [{pipeline_mode = #tpu.pipeline_mode<synchronous>, transform_indices = @transform_0, window_bounds = array<i64: 56, 41>}, {pipeline_mode = #tpu.pipeline_mode<synchronous>, transform_indices = @transform_1, window_bounds = array<i64: 4, 40>}, {transform_indices = @transform_2, window_bounds = array<i64: 41, 128>}, {transform_indices = @transform_3, window_bounds = array<i64: 8, 128>}]} {
    %c0 = arith.constant 0 : index
    %c0_0 = arith.constant 0 : index
    %0 = vector.load %arg1[%c0, %c0_0] : memref<56x41xbf16, #tpu.memory_space<vmem>>, vector<56x41xbf16>
    %c0_1 = arith.constant 0 : index
    %c0_2 = arith.constant 0 : index
    %1 = vector.load %arg3[%c0_1, %c0_2] : memref<41x128xbf16, #tpu.memory_space<vmem>>, vector<41x128xbf16>
    %cst = arith.constant dense<0.000000e+00> : vector<56x128xf32>
    %2 = tpu.matmul %0, %1, %cst {dimension_numbers = #tpu.dot_dimension_numbers<[1], [0], [0], [1], [0, 0, 1, 1], [], []>} : vector<56x41xbf16>, vector<41x128xbf16>, vector<56x128xf32> -> vector<56x128xf32>
    %3 = vector.extract_strided_slice %2 {offsets = [0, 0], sizes = [40, 128], strides = [1, 1]} : vector<56x128xf32> to vector<40x128xf32>
    %cst_3 = arith.constant 0.000000e+00 : f32
    %4 = vector.broadcast %cst_3 : f32 to vector<40x128xf32>
    %5 = arith.maximumf %3, %4 : vector<40x128xf32>
    %c0_4 = arith.constant 0 : index
    %c0_5 = arith.constant 0 : index
    %6 = vector.load %arg2[%c0_4, %c0_5] : memref<4x40xbf16, #tpu.memory_space<vmem>>, vector<4x40xbf16>
    %7 = arith.truncf %5 : vector<40x128xf32> to vector<40x128xbf16>
    %cst_6 = arith.constant dense<0.000000e+00> : vector<4x128xf32>
    %8 = tpu.matmul %6, %7, %cst_6 {dimension_numbers = #tpu.dot_dimension_numbers<[1], [0], [0], [1], [0, 0, 1, 1], [], []>} : vector<4x40xbf16>, vector<40x128xbf16>, vector<4x128xf32> -> vector<4x128xf32>
    %cst_7 = arith.constant dense<0xFF800000> : vector<128xf32>
    %9 = vector.multi_reduction <maximumf>, %8, %cst_7 [0] : vector<4x128xf32> to vector<128xf32>
    %10 = vector.shape_cast %9 : vector<128xf32> to vector<1x128xf32>
    %11 = vector.broadcast %10 : vector<1x128xf32> to vector<4x128xf32>
    %12 = arith.subf %8, %11 : vector<4x128xf32>
    %13 = math.exp %12 : vector<4x128xf32>
    %cst_8 = arith.constant dense<0.000000e+00> : vector<128xf32>
    %14 = vector.multi_reduction <add>, %13, %cst_8 [0] : vector<4x128xf32> to vector<128xf32>
    %15 = vector.shape_cast %14 : vector<128xf32> to vector<1x128xf32>
    %16 = tpu.reciprocal %15 {approx = true} : vector<1x128xf32> -> vector<1x128xf32>
    %17 = vector.broadcast %16 : vector<1x128xf32> to vector<4x128xf32>
    %18 = arith.mulf %13, %17 : vector<4x128xf32>
    %19 = vector.extract_strided_slice %2 {offsets = [40, 0], sizes = [16, 128], strides = [1, 1]} : vector<56x128xf32> to vector<16x128xf32>
    %20 = vector.extract_strided_slice %18 {offsets = [0, 0], sizes = [1, 128], strides = [1, 1]} : vector<4x128xf32> to vector<1x128xf32>
    %21 = vector.extract_strided_slice %19 {offsets = [0, 0], sizes = [4, 128], strides = [1, 1]} : vector<16x128xf32> to vector<4x128xf32>
    %22 = vector.broadcast %20 : vector<1x128xf32> to vector<4x128xf32>
    %23 = arith.mulf %22, %21 : vector<4x128xf32>
    %24 = vector.extract_strided_slice %18 {offsets = [1, 0], sizes = [1, 128], strides = [1, 1]} : vector<4x128xf32> to vector<1x128xf32>
    %25 = vector.extract_strided_slice %19 {offsets = [4, 0], sizes = [4, 128], strides = [1, 1]} : vector<16x128xf32> to vector<4x128xf32>
    %26 = vector.broadcast %24 : vector<1x128xf32> to vector<4x128xf32>
    %27 = arith.mulf %26, %25 : vector<4x128xf32>
    %28 = arith.addf %23, %27 : vector<4x128xf32>
    %29 = vector.extract_strided_slice %18 {offsets = [2, 0], sizes = [1, 128], strides = [1, 1]} : vector<4x128xf32> to vector<1x128xf32>
    %30 = vector.extract_strided_slice %19 {offsets = [8, 0], sizes = [4, 128], strides = [1, 1]} : vector<16x128xf32> to vector<4x128xf32>
    %31 = vector.broadcast %29 : vector<1x128xf32> to vector<4x128xf32>
    %32 = arith.mulf %31, %30 : vector<4x128xf32>
    %33 = arith.addf %28, %32 : vector<4x128xf32>
    %34 = vector.extract_strided_slice %18 {offsets = [3, 0], sizes = [1, 128], strides = [1, 1]} : vector<4x128xf32> to vector<1x128xf32>
    %35 = vector.extract_strided_slice %19 {offsets = [12, 0], sizes = [4, 128], strides = [1, 1]} : vector<16x128xf32> to vector<4x128xf32>
    %36 = vector.broadcast %34 : vector<1x128xf32> to vector<4x128xf32>
    %37 = arith.mulf %36, %35 : vector<4x128xf32>
    %38 = arith.addf %33, %37 : vector<4x128xf32>
    %39 = tpu.concatenate %38, %18 in 0 : vector<4x128xf32>, vector<4x128xf32> -> vector<8x128xf32>
    %c0_9 = arith.constant 0 : index
    %c0_10 = arith.constant 0 : index
    %40 = vector.load %arg4[%c0_9, %c0_10] : memref<8x128xf32, #tpu.memory_space<vmem>>, vector<8x128xf32>
    tpu.vector_store %arg4[%c0_9, %c0_10], %39 {strides = array<i32>} : memref<8x128xf32, #tpu.memory_space<vmem>>, vector<8x128xf32>,
    return
  }
  func.func @transform_0(%arg0: i32) -> (i32, i32) {
    %c0_i32 = arith.constant 0 : i32
    %c0_i32_0 = arith.constant 0 : i32
    %c0_i32_1 = arith.constant 0 : i32
    return %c0_i32, %c0_i32_0 : i32, i32
  }
  func.func @transform_1(%arg0: i32) -> (i32, i32) {
    %c0_i32 = arith.constant 0 : i32
    %c0_i32_0 = arith.constant 0 : i32
    %c0_i32_1 = arith.constant 0 : i32
    return %c0_i32, %c0_i32_0 : i32, i32
  }
  func.func @transform_2(%arg0: i32) -> (i32, i32) {
    %c0_i32 = arith.constant 0 : i32
    %c0_i32_0 = arith.constant 0 : i32
    return %c0_i32, %arg0 : i32, i32
  }
  func.func @transform_3(%arg0: i32) -> (i32, i32) {
    %c0_i32 = arith.constant 0 : i32
    %c0_i32_0 = arith.constant 0 : i32
    return %c0_i32, %arg0 : i32, i32
  }
}

</mosaic_0001>

<llo_original>
// kernel: tpu_custom_call.1
$region0: #{tpu_custom_call.1}
  #allocation0 [shape = 'u32[]', space=smem, size = 0x4, offset = 0x4, fixed_abs, tag = 'smem constant byte address 0x4 - core index']
  #allocation1 [shape = 'u32[72,128]{1,0:T(1,128)}', space=vmem, size = 0x9000, scoped, tag = 'internal scratch']
  %s0 = inlined_call_operand.vmem [shape: bf16[56,41], index: 0, kind: input, shape index: {}]
  %s1 = inlined_call_operand.vmem [shape: bf16[4,40], index: 1, kind: input, shape index: {}]
  %s2 = inlined_call_operand.vmem [shape: bf16[41,128], index: 2, kind: input, shape index: {}]
  %s3 = inlined_call_operand.hbm [shape: f32[8,128], index: 3, kind: output, shape index: {}]
  %s4 = sld [smem:[#allocation0]]
  $region22: #{tpu_custom_call.1} parent=0
    _
  %s6 = ssub.s32 1, %s4
  %s7 = scalar_select 0, %s6, %s4
  $region1: #{tpu_custom_call.1} parent=0
    #allocation2 [shape = 'u8[4096]{0}', space=vmem, size = 0x1000, scoped, tag = 'output window, operand 0, single buffered']
    #allocation3 [shape = 's32[1]{0}', space=sflag, size = 0x4, scoped, tag = 'scoped memory for tpu_custom_call.1']
    %8 = vsyncpa [#allocation3], 0
    // Predicated region
    $region2: #{tpu_custom_call.1} parent=1 // pred_check
      _
    $region3: #{tpu_custom_call.1} parent=1 // pred_check_branch
      %10 = sbr.rel (0) target = $region5
    $region4: #{tpu_custom_call.1} parent=1 // pred_region
      _
    $region5: #{tpu_custom_call.1} parent=1 // pred_fallthru
      _
    // Predicated region
    $region6: #{tpu_custom_call.1} parent=1 // pred_check
      _
    $region7: #{tpu_custom_call.1} parent=1 // pred_check_branch
      %12 = sbr.rel (0) target = $region9
    $region8: #{tpu_custom_call.1} parent=1 // pred_region
      _
    $region9: #{tpu_custom_call.1} parent=1 // pred_fallthru
      _
    // Predicated region
    $region10: #{tpu_custom_call.1} parent=1 // pred_check
      _
    $region11: #{tpu_custom_call.1} parent=1 // pred_check_branch
      %14 = sbr.rel (0) target = $region13
    $region12: #{tpu_custom_call.1} parent=1 // pred_region
      _
    $region13: #{tpu_custom_call.1} parent=1 // pred_fallthru
      _
    %v16 = vld [vmem:[%s0] sm:$0xf]
    %v17 = vld [vmem:[%s0 + $0x4] sm:$0xf]
    %v18 = vld [vmem:[%s0 + $0x8] sm:$0xf]
    %v19 = vld [vmem:[%s0 + $0xc] sm:$0xf]
    %v20 = vld [vmem:[%s0 + $0x10] sm:$0xf]
    %v21 = vld [vmem:[%s0 + $0x14] sm:$0xf]
    %v22 = vld [vmem:[%s0 + $0x18] sm:$0xf]
    %v23 = vld [vmem:[%s2] sm:$0xf]
    %v24 = vld [vmem:[%s2 + $0x4] sm:$0xf]
    %v25 = vld [vmem:[%s2 + $0x8] sm:$0xf]
    %v26 = vld [vmem:[%s2 + $0xc] sm:$0xf]
    %v27 = vld [vmem:[%s2 + $0x10] sm:$0xf]
    %v28 = vld [vmem:[%s2 + $0x14] sm:$0x1]
    %v36 = vunpack.c.l.b16 %v16
    %v37 = vunpack.c.l.b16 %v17
    %v38 = vunpack.c.l.b16 %v18
    %v39 = vunpack.c.l.b16 %v19
    %v40 = vunpack.c.l.b16 %v20
    %v41 = vunpack.c.l.b16 %v21
    %v42 = vunpack.c.l.b16 %v22
    %v43 = vpack.c.b16 %v37, %v36
    %v44 = vpack.c.b16 %v39, %v38
    %v45 = vpack.c.b16 %v41, %v40
    %v46 = vpack.c.b16 %v42, %v42
    %v53 = vunpack.c.l.b16 %v23
    %v54 = vunpack.c.l.b16 %v24
    %v55 = vunpack.c.l.b16 %v25
    %v56 = vunpack.c.l.b16 %v26
    %v57 = vunpack.c.l.b16 %v27
    %v58 = vunpack.c.l.b16 %v28
    %v59 = vpack.c.b16 %v54, %v53
    %v60 = vpack.c.b16 %v56, %v55
    %v61 = vpack.c.b16 %v58, %v57
    %vm64 = vcmask 334848
    %v66 = vsel %vm64, %v43, 0
    %v69 = vsel %vm64, %v44, 0
    %v72 = vsel %vm64, %v45, 0
    %v75 = vsel %vm64, %v46, 0
    %vm77 = vcmask 1043456
    %vm78 = vcmask 1044480
    %v79 = vsel %vm77, 4294967295, 65535
    %v80 = vsel %vm78, %v79, 0
    %v82 = vand.u32 %v61, %v80
    %84 = vmatpush.bf16.msra.mxu0 0
    %85 = vmatpush.bf16.msra.mxu0 0
    %86 = vmatpush.bf16.msra.mxu0 0
    %87 = vmatpush.bf16.msra.mxu0 0
    %88 = vmatpush.bf16.msra.mxu0 0
    %89 = vmatpush.bf16.msra.mxu0 %v82
    %90 = vmatpush.bf16.msra.mxu0 %v60
    %91 = vmatpush.bf16.msra.mxu0 %v59
    %92 = vmatmul.bf16.gmra.mxu0 %v66
    %v93 = vpop.f32.mrf.mxu0
    %v94 = vadd.f32 0.0, %v93
    %v95 = vpop.f32.mrf.mxu0
    %v96 = vadd.f32 0.0, %v95
    %97 = vmatmul.bf16.gmra.mxu0 %v69
    %v98 = vpop.f32.mrf.mxu0
    %v99 = vadd.f32 0.0, %v98
    %v100 = vpop.f32.mrf.mxu0
    %v101 = vadd.f32 0.0, %v100
    %102 = vmatmul.bf16.gmra.mxu0 %v72
    %v103 = vpop.f32.mrf.mxu0
    %v104 = vadd.f32 0.0, %v103
    %v105 = vpop.f32.mrf.mxu0
    %v106 = vadd.f32 0.0, %v105
    %107 = vmatmul.bf16.gmra.mxu0 %v75
    %v108 = vpop.f32.mrf.mxu0
    %v109 = vadd.f32 0.0, %v108
    %v110 = vpop.f32.mrf.mxu0
    %111 = vdwg.mxu0
    %v112 = vmax.f32 %v94, 0.0
    %v113 = vmax.f32 %v96, 0.0
    %v114 = vmax.f32 %v99, 0.0
    %v115 = vmax.f32 %v101, 0.0
    %v116 = vmax.f32 %v104, 0.0
    %v117 = vld [vmem:[%s1] sm:$0x3]
    %v118 = vpack.c.bf16 %v113, %v112
    %v119 = vpack.c.bf16 %v115, %v114
    %v120 = vpack.c.bf16 %v116, %v116
    %vm121 = vcmask 326656
    %v123 = vsel %vm121, %v117, 0
    %v126 = vsel %vm77, %v120, 0
    %128 = vmatpush.bf16.msra.mxu0 0
    %129 = vmatpush.bf16.msra.mxu0 0
    %130 = vmatpush.bf16.msra.mxu0 0
    %131 = vmatpush.bf16.msra.mxu0 0
    %132 = vmatpush.bf16.msra.mxu0 0
    %133 = vmatpush.bf16.msra.mxu0 %v126
    %134 = vmatpush.bf16.msra.mxu0 %v119
    %135 = vmatpush.bf16.msra.mxu0 %v118
    %136 = vmatmul.bf16.gmra.mxu0 %v123
    %v137 = vpop.f32.mrf.mxu0
    %v138 = vadd.f32 0.0, %v137
    %v139 = vpop.f32.mrf.mxu0
    %140 = vdwg.mxu0
    %v141 = vsel %vm77, %v138, -inf
    %v142 = vrot.slane %v141, 4
    %v143 = vmax.f32 %v141, %v142
    %v144 = vrot.slane %v143, 2
    %v145 = vmax.f32 %v143, %v144
    %v146 = vrot.slane %v145, 1
    %v147 = vmax.f32 %v145, %v146
    %v148 = vsub.f32 %v138, %v147
    %v149 = vmul.f32 %v148, 1.442695
    %v150 = vpow.pop %v149
    %v151 = vsel %vm77, %v150, 0.0
    %v152 = vrot.slane %v151, 4
    %v153 = vadd.f32 %v151, %v152
    %v154 = vrot.slane %v153, 2
    %v155 = vadd.f32 %v153, %v154
    %v156 = vrot.slane %v155, 1
    %v157 = vadd.f32 %v155, %v156
    %v158 = vrcp.pop %v157
    %v159 = vmul.f32 %v150, %v158
    %v160 = vperm.slane %v159, 0
    %v161 = vmul.f32 %v160, %v106
    %v162 = vperm.slane %v159, 1
    %v163 = vmul.f32 %v162, %v106
    %v165 = vrot.slane %v163, 4
    %v167 = vadd.f32 %v161, %v165
    %v168 = vperm.slane %v159, 2
    %v169 = vmul.f32 %v168, %v109
    %v170 = vadd.f32 %v167, %v169
    %v171 = vperm.slane %v159, 3
    %v172 = vmul.f32 %v171, %v109
    %v174 = vrot.slane %v172, 4
    %v176 = vadd.f32 %v170, %v174
    %v178 = vrot.slane %v159, 4
    %v180 = vsel %vm77, %v176, %v178
    %181 = vst [vmem:[#allocation2] sm:$0xff] %v180
    // Predicated region
    $region14: #{tpu_custom_call.1} parent=1 // pred_check
      _
    $region15: #{tpu_custom_call.1} parent=1 // pred_check_branch
      %183 = sbr.rel (0) target = $region17
    $region16: #{tpu_custom_call.1} parent=1 // pred_region
      %185 = vsyncadd [#allocation3], 0
      %s187 = sshll.u32 [#allocation2], 4
      %s188 = int_to_ptr.vmem [resolvable:$true] %s187
      %s189 = sshll.u32 %s3, 4
      %s190 = int_to_ptr.hbm [resolvable:$true] %s189
      %192 = dma.vmem_to_hbm [thread:$0]  %s188, 128, %s190, [#allocation3]
    $region17: #{tpu_custom_call.1} parent=1 // pred_fallthru
      _
    // Predicated region
    $region18: #{tpu_custom_call.1} parent=1 // pred_check
      _
    $region19: #{tpu_custom_call.1} parent=1 // pred_check_branch
      %194 = sbr.rel (0) target = $region21
    $region20: #{tpu_custom_call.1} parent=1 // pred_region
      %196 = dma.done [#allocation3], 128
    $region21: #{tpu_custom_call.1} parent=1 // pred_fallthru
      _
    %197 = vsyncpa [#allocation3], 1

</llo_original>
